<compile_context>
chip_gen: v5e
topology: v5e:2x2
jax: 0.10.0
libtpu: 0.0.40
codegen_flags: <defaults>
</compile_context>

<pallas_src>
import jax
import jax.numpy as jnp
import numpy as np
from jax.experimental import pallas as pl
from jax.experimental.pallas import tpu as pltpu


def classifier_kernel(a_ref, color_ref, pool_ref, params_ref, w2_ref, wc_ref, out_ref):
    """One grid step == one graph of the batched (block-diagonal) graph."""
    a = a_ref[...]                        # (MAXN, MAXN) bf16  normalized adjacency block
    color = color_ref[...]                # (MAXN, 1)    f32   node feature (in_dim == 1)
    w1_row = params_ref[0:1, :]           # (1, Hp) f32
    b1 = params_ref[1:2, :]               # (1, Hp) f32
    b2 = params_ref[2:3, :]               # (1, Hp) f32
    bc = params_ref[3:4, :]               # (1, Cp) f32   (Cp == Hp == 128)

    # GraphConv 1: in_dim == 1, so X @ W1 is an outer product -> VPU only, no MXU pass.
    xw = (color * w1_row).astype(jnp.bfloat16)                        # (MAXN, Hp)
    h1 = jnp.dot(a, xw, preferred_element_type=jnp.float32) + b1      # f32 accumulation
    h1 = jnp.maximum(h1, 0.0)                                         # f32 epilogue

    # GraphConv 2: relu(A_hat @ (h1 @ W2) + b2), bf16 MXU inputs, f32 accumulation.
    hw = jnp.dot(h1.astype(jnp.bfloat16), w2_ref[...],
                 preferred_element_type=jnp.float32)
    h2 = jnp.dot(a, hw.astype(jnp.bfloat16),
                 preferred_element_type=jnp.float32) + b2
    h2 = jnp.maximum(h2, 0.0)

    # dgl.mean_nodes (masked per-graph mean: pool row = 1/n_g on real nodes, 0 on pads)
    # fused with the final Linear classifier -> one lane-dense (1, Cp) output row.
    hg = jnp.dot(pool_ref[...], h2, preferred_element_type=jnp.float32)   # (1, Hp)
    out_ref[...] = jnp.dot(hg, wc_ref[...],
                           preferred_element_type=jnp.float32) + bc       # (1, Cp)


def classifier_forward(a_blocks, color, pool, params_small, w2, wc):
    G, MAXN, _ = a_blocks.shape
    Hp = w2.shape[0]
    Cp = wc.shape[1]

    flops_per_graph = (4 * MAXN * MAXN * Hp     # two A_hat aggregations
                       + 2 * MAXN * Hp * Hp     # h1 @ W2
                       + 2 * MAXN * Hp          # mean pooling
                       + 2 * Hp * Cp)           # classifier
    bytes_accessed = int(a_blocks.size * a_blocks.dtype.itemsize
                         + color.size * 4 + pool.size * 4
                         + params_small.size * 4
                         + w2.size * w2.dtype.itemsize
                         + wc.size * 4 + G * Cp * 4)

    return pl.pallas_call(
        classifier_kernel,
        out_shape=jax.ShapeDtypeStruct((G, 1, Cp), jnp.float32),
        grid=(G,),
        in_specs=[
            pl.BlockSpec((None, MAXN, MAXN), lambda g: (g, 0, 0)),  # per-graph A_hat block
            pl.BlockSpec((None, MAXN, 1),    lambda g: (g, 0, 0)),  # per-graph color column
            pl.BlockSpec((None, 1, MAXN),    lambda g: (g, 0, 0)),  # per-graph mean-pool row
            pl.BlockSpec((8, Hp),  lambda g: (0, 0)),               # packed w1/b1/b2/bc (VMEM-resident)
            pl.BlockSpec((Hp, Hp), lambda g: (0, 0)),               # W2 (resident)
            pl.BlockSpec((Hp, Cp), lambda g: (0, 0)),               # Wc (resident)
        ],
        out_specs=pl.BlockSpec((None, 1, Cp), lambda g: (g, 0, 0)),
        compiler_params=pltpu.CompilerParams(
            dimension_semantics=("parallel",),       # graphs are independent -> megacore split
            vmem_limit_bytes=32 * 1024 * 1024),      # explicit budget; headroom on v7x (64 MiB)
        cost_estimate=pl.CostEstimate(
            flops=int(G * flops_per_graph),
            transcendentals=0,
            bytes_accessed=bytes_accessed),
    )(a_blocks, color, pool, params_small, w2, wc)


if __name__ == "__main__":
    key = jax.random.PRNGKey(0)
    hidden_dim, n_classes = 32, 4
    Hp = 128          # hidden padded to a full 128-lane vreg width
    Cp = 128          # classifier output padded to a full lane width (sliced back afterwards)
    nodes_per_graph = [12, 9]          # 2 small graphs batched into one block-diagonal graph
    G = len(nodes_per_graph)
    MAXN = max(128, -(-max(nodes_per_graph) // 128) * 128)   # per-graph node padding (lane aligned)

    # Per-graph bidirectional cycle graphs packed as dense zero-padded blocks.
    a_blocks_np = np.zeros((G, MAXN, MAXN), np.float32)
    pool_np = np.zeros((G, 1, MAXN), np.float32)
    mask_np = np.zeros((G, MAXN), np.float32)
    for g, n in enumerate(nodes_per_graph):
        A = np.zeros((n, n), np.float32)
        for i in range(n):
            A[i, (i + 1) % n] = 1.0
            A[(i + 1) % n, i] = 1.0
        deg = A.sum(axis=1)
        a_blocks_np[g, :n, :n] = (deg ** -0.5)[:, None] * A * (deg ** -0.5)[None, :]
        pool_np[g, 0, :n] = 1.0 / n
        mask_np[g, :n] = 1.0

    keys = jax.random.split(key, 7)
    color = (jax.random.randint(keys[0], (G, MAXN), 0, 5).astype(jnp.float32)
             * jnp.asarray(mask_np))[:, :, None]                           # [G, MAXN, 1]

    # Parameters, zero-padded to lane-dense shapes (padded rows/cols are exact zeros).
    w1_row = jnp.zeros((1, Hp), jnp.float32).at[0, :hidden_dim].set(
        jax.random.normal(keys[1], (hidden_dim,), jnp.float32) * 0.5)
    b1 = jnp.zeros((1, Hp), jnp.float32).at[0, :hidden_dim].set(
        jax.random.normal(keys[2], (hidden_dim,), jnp.float32) * 0.1)
    w2 = jnp.zeros((Hp, Hp), jnp.float32).at[:hidden_dim, :hidden_dim].set(
        jax.random.normal(keys[3], (hidden_dim, hidden_dim), jnp.float32) / np.sqrt(hidden_dim))
    b2 = jnp.zeros((1, Hp), jnp.float32).at[0, :hidden_dim].set(
        jax.random.normal(keys[4], (hidden_dim,), jnp.float32) * 0.1)
    wc = jnp.zeros((Hp, Cp), jnp.float32).at[:hidden_dim, :n_classes].set(
        jax.random.normal(keys[5], (hidden_dim, n_classes), jnp.float32) / np.sqrt(hidden_dim))
    bc = jnp.zeros((1, Cp), jnp.float32).at[0, :n_classes].set(
        jax.random.normal(keys[6], (n_classes,), jnp.float32) * 0.1)

    # Pack the tiny (1, 128) vectors into one (8, 128) VMEM-resident operand (single DMA).
    params_small = (jnp.zeros((8, Hp), jnp.float32)
                    .at[0].set(w1_row[0]).at[1].set(b1[0])
                    .at[2].set(b2[0]).at[3].set(bc[0]))

    a_bf = jnp.asarray(a_blocks_np, dtype=jnp.bfloat16)   # bf16 MXU inputs (f32 accumulation in-kernel)
    w2_bf = w2.astype(jnp.bfloat16)
    pool_j = jnp.asarray(pool_np)

    out_full = classifier_forward(a_bf, color, pool_j, params_small, w2_bf, wc)
    out_full = jax.block_until_ready(out_full)
    out = np.asarray(out_full)[:, 0, :n_classes]

    # Pure-JAX f32 reference (original module semantics on the same batched graph).
    a_f = jnp.asarray(a_blocks_np)
    xw_ref = color * w1_row                                            # [G, MAXN, Hp]
    h1_ref = jnp.maximum(jnp.einsum('gnm,gmh->gnh', a_f, xw_ref) + b1, 0.0)
    h2_ref = jnp.maximum(jnp.einsum('gnm,gmh->gnh', a_f, h1_ref @ w2) + b2, 0.0)
    hg_ref = jnp.einsum('gom,gmh->goh', pool_j, h2_ref)[:, 0, :]       # [G, Hp]
    ref = np.asarray(hg_ref @ wc + bc)[:, :n_classes]

    assert out.shape == (G, n_classes)
    assert np.allclose(out, ref, rtol=5e-2, atol=1e-1), (out, ref)
    print("KERNEL_OK")
</pallas_src>

<mosaic_0001>
module attributes {stable_mosaic.version = 11 : i64} {
  func.func @classifier_kernel(%arg0: i32, %arg1: memref<1x128x128xbf16, #tpu.memory_space<vmem>>, %arg2: memref<1x128x1xf32, #tpu.memory_space<vmem>>, %arg3: memref<1x1x128xf32, #tpu.memory_space<vmem>>, %arg4: memref<8x128xf32, #tpu.memory_space<vmem>>, %arg5: memref<128x128xbf16, #tpu.memory_space<vmem>>, %arg6: memref<128x128xf32, #tpu.memory_space<vmem>>, %arg7: memref<1x1x128xf32, #tpu.memory_space<vmem>>) attributes {dimension_semantics = [#tpu.dimension_semantics<parallel>], iteration_bounds = array<i64: 2>, scalar_prefetch = 0 : i64, scratch_operands = 0 : i64, tpu.core_type = #tpu.core_type<tc>, window_params = [{transform_indices = @transform_0, window_bounds = array<i64: 1, 128, 128>}, {transform_indices = @transform_1, window_bounds = array<i64: 1, 128, 1>}, {transform_indices = @transform_2, window_bounds = array<i64: 1, 1, 128>}, {pipeline_mode = #tpu.pipeline_mode<synchronous>, transform_indices = @transform_3, window_bounds = array<i64: 8, 128>}, {pipeline_mode = #tpu.pipeline_mode<synchronous>, transform_indices = @transform_4, window_bounds = array<i64: 128, 128>}, {pipeline_mode = #tpu.pipeline_mode<synchronous>, transform_indices = @transform_5, window_bounds = array<i64: 128, 128>}, {transform_indices = @transform_6, window_bounds = array<i64: 1, 1, 128>}]} {
    %c0 = arith.constant 0 : index
    %c0_0 = arith.constant 0 : index
    %c0_1 = arith.constant 0 : index
    %0 = vector.load %arg1[%c0, %c0_0, %c0_1] : memref<1x128x128xbf16, #tpu.memory_space<vmem>>, vector<1x128x128xbf16>
    %1 = vector.shape_cast %0 : vector<1x128x128xbf16> to vector<128x128xbf16>
    %c0_2 = arith.constant 0 : index
    %c0_3 = arith.constant 0 : index
    %c0_4 = arith.constant 0 : index
    %2 = vector.load %arg2[%c0_2, %c0_3, %c0_4] : memref<1x128x1xf32, #tpu.memory_space<vmem>>, vector<1x128x1xf32>
    %3 = vector.shape_cast %2 : vector<1x128x1xf32> to vector<128x1xf32>
    %c0_5 = arith.constant 0 : index
    %c0_6 = arith.constant 0 : index
    %4 = vector.load %arg4[%c0_5, %c0_6] : memref<8x128xf32, #tpu.memory_space<vmem>>, vector<1x128xf32>
    %c1 = arith.constant 1 : index
    %c0_7 = arith.constant 0 : index
    %5 = vector.load %arg4[%c1, %c0_7] : memref<8x128xf32, #tpu.memory_space<vmem>>, vector<1x128xf32>
    %c2 = arith.constant 2 : index
    %c0_8 = arith.constant 0 : index
    %6 = vector.load %arg4[%c2, %c0_8] : memref<8x128xf32, #tpu.memory_space<vmem>>, vector<1x128xf32>
    %c3 = arith.constant 3 : index
    %c0_9 = arith.constant 0 : index
    %7 = vector.load %arg4[%c3, %c0_9] : memref<8x128xf32, #tpu.memory_space<vmem>>, vector<1x128xf32>
    %8 = vector.broadcast %3 : vector<128x1xf32> to vector<128x128xf32>
    %9 = vector.broadcast %4 : vector<1x128xf32> to vector<128x128xf32>
    %10 = arith.mulf %8, %9 : vector<128x128xf32>
    %11 = arith.truncf %10 : vector<128x128xf32> to vector<128x128xbf16>
    %cst = arith.constant dense<0.000000e+00> : vector<128x128xf32>
    %12 = tpu.matmul %1, %11, %cst {dimension_numbers = #tpu.dot_dimension_numbers<[1], [0], [0], [1], [0, 0, 1, 1], [], []>} : vector<128x128xbf16>, vector<128x128xbf16>, vector<128x128xf32> -> vector<128x128xf32>
    %13 = vector.broadcast %5 : vector<1x128xf32> to vector<128x128xf32>
    %14 = arith.addf %12, %13 : vector<128x128xf32>
    %cst_10 = arith.constant 0.000000e+00 : f32
    %15 = vector.broadcast %cst_10 : f32 to vector<128x128xf32>
    %16 = arith.maximumf %14, %15 : vector<128x128xf32>
    %17 = arith.truncf %16 : vector<128x128xf32> to vector<128x128xbf16>
    %c0_11 = arith.constant 0 : index
    %c0_12 = arith.constant 0 : index
    %18 = vector.load %arg5[%c0_11, %c0_12] : memref<128x128xbf16, #tpu.memory_space<vmem>>, vector<128x128xbf16>
    %cst_13 = arith.constant dense<0.000000e+00> : vector<128x128xf32>
    %19 = tpu.matmul %17, %18, %cst_13 {dimension_numbers = #tpu.dot_dimension_numbers<[1], [0], [0], [1], [0, 0, 1, 1], [], []>} : vector<128x128xbf16>, vector<128x128xbf16>, vector<128x128xf32> -> vector<128x128xf32>
    %20 = arith.truncf %19 : vector<128x128xf32> to vector<128x128xbf16>
    %cst_14 = arith.constant dense<0.000000e+00> : vector<128x128xf32>
    %21 = tpu.matmul %1, %20, %cst_14 {dimension_numbers = #tpu.dot_dimension_numbers<[1], [0], [0], [1], [0, 0, 1, 1], [], []>} : vector<128x128xbf16>, vector<128x128xbf16>, vector<128x128xf32> -> vector<128x128xf32>
    %22 = vector.broadcast %6 : vector<1x128xf32> to vector<128x128xf32>
    %23 = arith.addf %21, %22 : vector<128x128xf32>
    %cst_15 = arith.constant 0.000000e+00 : f32
    %24 = vector.broadcast %cst_15 : f32 to vector<128x128xf32>
    %25 = arith.maximumf %23, %24 : vector<128x128xf32>
    %c0_16 = arith.constant 0 : index
    %c0_17 = arith.constant 0 : index
    %c0_18 = arith.constant 0 : index
    %26 = vector.load %arg3[%c0_16, %c0_17, %c0_18] : memref<1x1x128xf32, #tpu.memory_space<vmem>>, vector<1x1x128xf32>
    %27 = vector.shape_cast %26 : vector<1x1x128xf32> to vector<1x128xf32>
    %cst_19 = arith.constant dense<0.000000e+00> : vector<1x128xf32>
    %28 = tpu.matmul %27, %25, %cst_19 {dimension_numbers = #tpu.dot_dimension_numbers<[1], [0], [0], [1], [0, 0, 1, 1], [], []>} : vector<1x128xf32>, vector<128x128xf32>, vector<1x128xf32> -> vector<1x128xf32>
    %c0_20 = arith.constant 0 : index
    %c0_21 = arith.constant 0 : index
    %29 = vector.load %arg6[%c0_20, %c0_21] : memref<128x128xf32, #tpu.memory_space<vmem>>, vector<128x128xf32>
    %cst_22 = arith.constant dense<0.000000e+00> : vector<1x128xf32>
    %30 = tpu.matmul %28, %29, %cst_22 {dimension_numbers = #tpu.dot_dimension_numbers<[1], [0], [0], [1], [0, 0, 1, 1], [], []>} : vector<1x128xf32>, vector<128x128xf32>, vector<1x128xf32> -> vector<1x128xf32>
    %31 = arith.addf %30, %7 : vector<1x128xf32>
    %c0_23 = arith.constant 0 : index
    %c0_24 = arith.constant 0 : index
    %c0_25 = arith.constant 0 : index
    %32 = vector.load %arg7[%c0_23, %c0_24, %c0_25] : memref<1x1x128xf32, #tpu.memory_space<vmem>>, vector<1x1x128xf32>
    %33 = vector.shape_cast %32 : vector<1x1x128xf32> to vector<1x128xf32>
    %34 = vector.shape_cast %31 : vector<1x128xf32> to vector<1x1x128xf32>
    tpu.vector_store %arg7[%c0_23, %c0_24, %c0_25], %34 {strides = array<i32>} : memref<1x1x128xf32, #tpu.memory_space<vmem>>, vector<1x1x128xf32>,
    return
  }
  func.func @transform_0(%arg0: i32) -> (i32, i32, i32) {
    %c0_i32 = arith.constant 0 : i32
    %c0_i32_0 = arith.constant 0 : i32
    %c0_i32_1 = arith.constant 0 : i32
    return %arg0, %c0_i32, %c0_i32_0 : i32, i32, i32
  }
  func.func @transform_1(%arg0: i32) -> (i32, i32, i32) {
    %c0_i32 = arith.constant 0 : i32
    %c0_i32_0 = arith.constant 0 : i32
    %c0_i32_1 = arith.constant 0 : i32
    return %arg0, %c0_i32, %c0_i32_0 : i32, i32, i32
  }
  func.func @transform_2(%arg0: i32) -> (i32, i32, i32) {
    %c0_i32 = arith.constant 0 : i32
    %c0_i32_0 = arith.constant 0 : i32
    %c0_i32_1 = arith.constant 0 : i32
    return %arg0, %c0_i32, %c0_i32_0 : i32, i32, i32
  }
  func.func @transform_3(%arg0: i32) -> (i32, i32) {
    %c0_i32 = arith.constant 0 : i32
    %c0_i32_0 = arith.constant 0 : i32
    %c0_i32_1 = arith.constant 0 : i32
    return %c0_i32, %c0_i32_0 : i32, i32
  }
  func.func @transform_4(%arg0: i32) -> (i32, i32) {
    %c0_i32 = arith.constant 0 : i32
    %c0_i32_0 = arith.constant 0 : i32
    %c0_i32_1 = arith.constant 0 : i32
    return %c0_i32, %c0_i32_0 : i32, i32
  }
  func.func @transform_5(%arg0: i32) -> (i32, i32) {
    %c0_i32 = arith.constant 0 : i32
    %c0_i32_0 = arith.constant 0 : i32
    %c0_i32_1 = arith.constant 0 : i32
    return %c0_i32, %c0_i32_0 : i32, i32
  }
  func.func @transform_6(%arg0: i32) -> (i32, i32, i32) {
    %c0_i32 = arith.constant 0 : i32
    %c0_i32_0 = arith.constant 0 : i32
    %c0_i32_1 = arith.constant 0 : i32
    return %arg0, %c0_i32, %c0_i32_0 : i32, i32, i32
  }
}

</mosaic_0001>

<llo_original>
// kernel: tpu_custom_call.1
$region0: #{tpu_custom_call.1}
  #allocation0 [shape = 'u32[]', space=smem, size = 0x4, offset = 0x4, fixed_abs, tag = 'smem constant byte address 0x4 - core index']
  #allocation1 [shape = 'u32[72,128]{1,0:T(1,128)}', space=vmem, size = 0x9000, scoped, tag = 'internal scratch']
  %s0 = inlined_call_operand.vmem [shape: bf16[2,128,128], index: 0, kind: input, shape index: {}]
  %s1 = inlined_call_operand.vmem [shape: f32[2,128,1], index: 1, kind: input, shape index: {}]
  %s2 = inlined_call_operand.vmem [shape: f32[2,1,128], index: 2, kind: input, shape index: {}]
  %s3 = inlined_call_operand.hbm [shape: f32[8,128], index: 3, kind: input, shape index: {}]
  %s4 = inlined_call_operand.hbm [shape: bf16[128,128], index: 4, kind: input, shape index: {}]
  %s5 = inlined_call_operand.vmem [shape: f32[128,128], index: 5, kind: input, shape index: {}]
  %s6 = inlined_call_operand.hbm [shape: f32[2,1,128], index: 6, kind: output, shape index: {}]
  %s7 = sld [smem:[#allocation0]]
  $region65: #{tpu_custom_call.1} parent=0
    _
  %s9 = ssub.s32 1, %s7
  %s10 = scalar_select 0, %s9, %s7
  $region1: #{tpu_custom_call.1} parent=0
    #allocation2 [shape = 'u8[4096]{0}', space=vmem, size = 0x1000, scoped, tag = 'input window, operand 3, single buffered']
    #allocation3 [shape = 's32[2]{0}', space=sflag, size = 0x8, scoped, tag = 'scoped memory for tpu_custom_call.1']
    #allocation4 [shape = 's32[2]{0}', space=sflag, size = 0x8, scoped, tag = 'scoped memory for tpu_custom_call.1']
    #allocation5 [shape = 'u8[32768]{0}', space=vmem, size = 0x8000, scoped, tag = 'input window, operand 4, single buffered']
    #allocation6 [shape = 's32[1]{0}', space=sflag, size = 0x4, scoped, tag = 'scoped memory for tpu_custom_call.1']
    #allocation7 [shape = 'u8[1024]{0}', space=vmem, size = 0x400, scoped, tag = 'output window, operand 0']
    %11 = vsyncpa [#allocation3], 0
    %12 = vsyncpa [#allocation6], 0
    %13 = vsyncpa [#allocation4], 0
    %s14 = scalar_lea.sflag [#allocation4], 1
    %15 = vsyncpa %s14, 0
    loop: start=0, step=1, limit=4
    $region2: #{tpu_custom_call.1} parent=1 // loop_pre_header
      _
    $region3: #{tpu_custom_call.1} parent=1 // loop_header
      %s17 = sphi 0, %s21
      %p18 = scmp.ge.s32.totalorder %s17, 4
      %s27 = sphi 0, %s29
      %s30 = sphi 0, %s27
      %s31 = sphi 0, %s30
      %s47 = sphi 0, %s31
      %s53 = sphi 0, %s55
      %s56 = sphi 0, %s53
      %s57 = sphi 0, %s56
      %s73 = sphi 0, %s57
      %s79 = sphi 0, %s81
      %s82 = sphi 0, %s79
      %s83 = sphi 0, %s82
      %s99 = sphi 0, %s83
      %s103 = sphi 0, %s103
      %s105 = sphi 0, %s103
      %s106 = sphi 0, %s105
      %s120 = sphi 0, %s106
      %s124 = sphi 0, %s124
      %s126 = sphi 0, %s124
      %s127 = sphi 0, %s126
      %s141 = sphi 0, %s127
      %s145 = sphi 0, %s145
      %s147 = sphi 0, %s145
      %s148 = sphi 0, %s147
      %s162 = sphi 0, %s148
      %s168 = sphi 0, %s170
      %s171 = sphi 0, %s168
      %s172 = sphi 0, %s171
      %s188 = sphi 0, %s172
    $region4: #{tpu_custom_call.1} parent=1 // loop_header_branch
      %20 = sbr.rel (%p18) target = $region8
    $region5: #{tpu_custom_call.1} parent=1 // loop_body
      %s22 = ssub.s32 %s17, 1
      %s23 = ssub.s32 %s17, 2
      %s24 = sadd.s32 %s17, 1
      %s25 = ssub.s32 %s17, %s24
      %p26 = scmp.eq.s32.totalorder %s25, 0
      %s28 = sadd.s32 %s27, 1
      %s29 = scalar_select %p26, %s27, %s28
      %p32 = pneg %p26
      %p33 = scmp.eq.s32.totalorder %s17, 1
      %p34 = por %p32, %p33
      %p35 = scmp.ne.s32.totalorder %s27, %s30
      %p36 = scmp.eq.s32.totalorder %s17, 0
      %p37 = por %p35, %p36
      %p38 = scmp.ne.s32.totalorder %s27, %s30
      %p39 = scmp.eq.s32.totalorder %s22, 1
      %p40 = por %p38, %p39
      %p41 = scmp.ne.s32.totalorder %s30, %s31
      %p42 = scmp.eq.s32.totalorder %s22, 0
      %p43 = por %p41, %p42
      %p44 = scmp.ne.s32.totalorder %s30, %s31
      %p45 = scmp.eq.s32.totalorder %s23, 1
      %p46 = por %p44, %p45
      %p48 = scmp.ne.s32.totalorder %s31, %s47
      %p49 = scmp.eq.s32.totalorder %s23, 0
      %p50 = por %p48, %p49
      %s51 = ssub.s32 %s17, %s24
      %p52 = scmp.eq.s32.totalorder %s51, 0
      %s54 = sadd.s32 %s53, 1
      %s55 = scalar_select %p52, %s53, %s54
      %p58 = pneg %p52
      %p59 = scmp.eq.s32.totalorder %s17, 1
      %p60 = por %p58, %p59
      %p61 = scmp.ne.s32.totalorder %s53, %s56
      %p62 = scmp.eq.s32.totalorder %s17, 0
      %p63 = por %p61, %p62
      %p64 = scmp.ne.s32.totalorder %s53, %s56
      %p65 = scmp.eq.s32.totalorder %s22, 1
      %p66 = por %p64, %p65
      %p67 = scmp.ne.s32.totalorder %s56, %s57
      %p68 = scmp.eq.s32.totalorder %s22, 0
      %p69 = por %p67, %p68
      %p70 = scmp.ne.s32.totalorder %s56, %s57
      %p71 = scmp.eq.s32.totalorder %s23, 1
      %p72 = por %p70, %p71
      %p74 = scmp.ne.s32.totalorder %s57, %s73
      %p75 = scmp.eq.s32.totalorder %s23, 0
      %p76 = por %p74, %p75
      %s77 = ssub.s32 %s17, %s24
      %p78 = scmp.eq.s32.totalorder %s77, 0
      %s80 = sadd.s32 %s79, 1
      %s81 = scalar_select %p78, %s79, %s80
      %p84 = pneg %p78
      %p85 = scmp.eq.s32.totalorder %s17, 1
      %p86 = por %p84, %p85
      %p87 = scmp.ne.s32.totalorder %s79, %s82
      %p88 = scmp.eq.s32.totalorder %s17, 0
      %p89 = por %p87, %p88
      %p90 = scmp.ne.s32.totalorder %s79, %s82
      %p91 = scmp.eq.s32.totalorder %s22, 1
      %p92 = por %p90, %p91
      %p93 = scmp.ne.s32.totalorder %s82, %s83
      %p94 = scmp.eq.s32.totalorder %s22, 0
      %p95 = por %p93, %p94
      %p96 = scmp.ne.s32.totalorder %s82, %s83
      %p97 = scmp.eq.s32.totalorder %s23, 1
      %p98 = por %p96, %p97
      %p100 = scmp.ne.s32.totalorder %s83, %s99
      %p101 = scmp.eq.s32.totalorder %s23, 0
      %p102 = por %p100, %p101
      %s104 = sadd.s32 %s103, 1
      %p107 = scmp.eq.s32.totalorder %s17, 1
      %p108 = scmp.ne.s32.totalorder %s103, %s105
      %p109 = scmp.eq.s32.totalorder %s17, 0
      %p110 = por %p108, %p109
      %p111 = scmp.ne.s32.totalorder %s103, %s105
      %p112 = scmp.eq.s32.totalorder %s22, 1
      %p113 = por %p111, %p112
      %p114 = scmp.ne.s32.totalorder %s105, %s106
      %p115 = scmp.eq.s32.totalorder %s22, 0
      %p116 = por %p114, %p115
      %p117 = scmp.ne.s32.totalorder %s105, %s106
      %p118 = scmp.eq.s32.totalorder %s23, 1
      %p119 = por %p117, %p118
      %p121 = scmp.ne.s32.totalorder %s106, %s120
      %p122 = scmp.eq.s32.totalorder %s23, 0
      %p123 = por %p121, %p122
      %s125 = sadd.s32 %s124, 1
      %p128 = scmp.eq.s32.totalorder %s17, 1
      %p129 = scmp.ne.s32.totalorder %s124, %s126
      %p130 = scmp.eq.s32.totalorder %s17, 0
      %p131 = por %p129, %p130
      %p132 = scmp.ne.s32.totalorder %s124, %s126
      %p133 = scmp.eq.s32.totalorder %s22, 1
      %p134 = por %p132, %p133
      %p135 = scmp.ne.s32.totalorder %s126, %s127
      %p136 = scmp.eq.s32.totalorder %s22, 0
      %p137 = por %p135, %p136
      %p138 = scmp.ne.s32.totalorder %s126, %s127
      %p139 = scmp.eq.s32.totalorder %s23, 1
      %p140 = por %p138, %p139
      %p142 = scmp.ne.s32.totalorder %s127, %s141
      %p143 = scmp.eq.s32.totalorder %s23, 0
      %p144 = por %p142, %p143
      %s146 = sadd.s32 %s145, 1
      %p149 = scmp.eq.s32.totalorder %s17, 1
      %p150 = scmp.ne.s32.totalorder %s145, %s147
      %p151 = scmp.eq.s32.totalorder %s17, 0
      %p152 = por %p150, %p151
      %p153 = scmp.ne.s32.totalorder %s145, %s147
      %p154 = scmp.eq.s32.totalorder %s22, 1
      %p155 = por %p153, %p154
      %p156 = scmp.ne.s32.totalorder %s147, %s148
      %p157 = scmp.eq.s32.totalorder %s22, 0
      %p158 = por %p156, %p157
      %p159 = scmp.ne.s32.totalorder %s147, %s148
      %p160 = scmp.eq.s32.totalorder %s23, 1
      %p161 = por %p159, %p160
      %p163 = scmp.ne.s32.totalorder %s148, %s162
      %p164 = scmp.eq.s32.totalorder %s23, 0
      %p165 = por %p163, %p164
      %s166 = ssub.s32 %s17, %s24
      %p167 = scmp.eq.s32.totalorder %s166, 0
      %s169 = sadd.s32 %s168, 1
      %s170 = scalar_select %p167, %s168, %s169
      %p173 = pneg %p167
      %p174 = scmp.eq.s32.totalorder %s17, 1
      %p175 = por %p173, %p174
      %p176 = scmp.ne.s32.totalorder %s168, %s171
      %p177 = scmp.eq.s32.totalorder %s17, 0
      %p178 = por %p176, %p177
      %p179 = scmp.ne.s32.totalorder %s168, %s171
      %p180 = scmp.eq.s32.totalorder %s22, 1
      %p181 = por %p179, %p180
      %p182 = scmp.ne.s32.totalorder %s171, %s172
      %p183 = scmp.eq.s32.totalorder %s22, 0
      %p184 = por %p182, %p183
      %p185 = scmp.ne.s32.totalorder %s171, %s172
      %p186 = scmp.eq.s32.totalorder %s23, 1
      %p187 = por %p185, %p186
      %p189 = scmp.ne.s32.totalorder %s172, %s188
      %p190 = scmp.eq.s32.totalorder %s23, 0
      %p191 = por %p189, %p190
      %p192 = scmp.le.s32.totalorder 1, %s17
      %p193 = scmp.lt.s32.totalorder %s17, 3
      %p194 = pnand %p192, %p193
      %p195 = pneg %p194
      // Predicated region
      $region9: #{tpu_custom_call.1} parent=5 // pred_check
        _
      $region10: #{tpu_custom_call.1} parent=5 // pred_check_branch
        %197 = sbr.rel (%p194) target = $region12
      $region11: #{tpu_custom_call.1} parent=5 // pred_region
        %s198 = ssub.s32 %s17, 1
        // Predicated region
        $region13: #{tpu_custom_call.1} parent=11 // pred_check
          %p199 = pneg %p116
        $region14: #{tpu_custom_call.1} parent=11 // pred_check_branch
          %201 = sbr.rel (%p199) target = $region16
        $region15: #{tpu_custom_call.1} parent=11 // pred_region
          %203 = vsyncadd [#allocation3], 0
          %s205 = sshll.u32 %s3, 4
          %s206 = int_to_ptr.hbm [resolvable:$true] %s205
          %s207 = sshll.u32 [#allocation2], 4
          %s208 = int_to_ptr.vmem [resolvable:$true] %s207
          %210 = dma.hbm_to_vmem [thread:$0]  %s206, 128, %s208, [#allocation3]
        $region16: #{tpu_custom_call.1} parent=11 // pred_fallthru
          _
        // Predicated region
        $region17: #{tpu_custom_call.1} parent=11 // pred_check
          %p211 = pneg %p137
        $region18: #{tpu_custom_call.1} parent=11 // pred_check_branch
          %213 = sbr.rel (%p211) target = $region20
        $region19: #{tpu_custom_call.1} parent=11 // pred_region
          %215 = vsyncadd [#allocation6], 0
          %s216 = sshll.u32 %s4, 4
          %s217 = int_to_ptr.hbm [resolvable:$true] %s216
          %s218 = sshll.u32 [#allocation5], 4
          %s219 = int_to_ptr.vmem [resolvable:$true] %s218
          %224 = dma.hbm_to_vmem [thread:$0]  %s217, 1024, %s219, [#allocation6], 64, 64, 4
        $region20: #{tpu_custom_call.1} parent=11 // pred_fallthru
          _
        // Predicated region
        $region21: #{tpu_custom_call.1} parent=11 // pred_check
          %p225 = pneg %p158
        $region22: #{tpu_custom_call.1} parent=11 // pred_check_branch
          %227 = sbr.rel (%p225) target = $region24
        $region23: #{tpu_custom_call.1} parent=11 // pred_region
          _
        $region24: #{tpu_custom_call.1} parent=11 // pred_fallthru
          _
      $region12: #{tpu_custom_call.1} parent=5 // pred_fallthru
        _
      %p228 = scmp.lt.s32.totalorder %s17, 2
      // Predicated region
      $region25: #{tpu_custom_call.1} parent=5 // pred_check
        %p229 = pneg %p228
      $region26: #{tpu_custom_call.1} parent=5 // pred_check_branch
        %231 = sbr.rel (%p229) target = $region28
      $region27: #{tpu_custom_call.1} parent=5 // pred_region
        // Predicated region
        $region29: #{tpu_custom_call.1} parent=27 // pred_check
          %p232 = pneg %p37
        $region30: #{tpu_custom_call.1} parent=27 // pred_check_branch
          %234 = sbr.rel (%p232) target = $region32
        $region31: #{tpu_custom_call.1} parent=27 // pred_region
          %p235 = scmp.lt.s32.totalorder %s17, 1
          %s236 = scalar_select %p235, %s17, 1
          %s237 = smul.addr %s236, 16
          %s238 = smul.addr %s237, 4
          %s239 = scalar_lea.vmem %s0, %s238
        $region32: #{tpu_custom_call.1} parent=27 // pred_fallthru
          _
        // Predicated region
        $region33: #{tpu_custom_call.1} parent=27 // pred_check
          %p240 = pneg %p63
        $region34: #{tpu_custom_call.1} parent=27 // pred_check_branch
          %242 = sbr.rel (%p240) target = $region36
        $region35: #{tpu_custom_call.1} parent=27 // pred_region
          %p243 = scmp.lt.s32.totalorder %s17, 1
          %s244 = scalar_select %p243, %s17, 1
          %s245 = smul.addr %s244, 16
          %s246 = smul.addr %s245, 8
          %s247 = scalar_lea.vmem %s1, %s246
        $region36: #{tpu_custom_call.1} parent=27 // pred_fallthru
          _
        // Predicated region
        $region37: #{tpu_custom_call.1} parent=27 // pred_check
          %p248 = pneg %p89
        $region38: #{tpu_custom_call.1} parent=27 // pred_check_branch
          %250 = sbr.rel (%p248) target = $region40
        $region39: #{tpu_custom_call.1} parent=27 // pred_region
          %p251 = scmp.lt.s32.totalorder %s17, 1
          %s252 = scalar_select %p251, %s17, 1
          %s253 = scalar_lea.vmem %s2, %s252
        $region40: #{tpu_custom_call.1} parent=27 // pred_fallthru
          _
      $region28: #{tpu_custom_call.1} parent=5 // pred_fallthru
        _
      %p254 = scmp.le.s32.totalorder 1, %s17
      %p255 = scmp.lt.s32.totalorder %s17, 3
      %p256 = pnand %p254, %p255
      %p257 = pneg %p256
      // Predicated region
      $region41: #{tpu_custom_call.1} parent=5 // pred_check
        _
      $region42: #{tpu_custom_call.1} parent=5 // pred_check_branch
        %259 = sbr.rel (%p256) target = $region44
      $region43: #{tpu_custom_call.1} parent=5 // pred_region
        %s260 = ssub.s32 %s17, 1
        // Predicated region
        $region45: #{tpu_custom_call.1} parent=43 // pred_check
          %p261 = pneg %p116
        $region46: #{tpu_custom_call.1} parent=43 // pred_check_branch
          %263 = sbr.rel (%p261) target = $region48
        $region47: #{tpu_custom_call.1} parent=43 // pred_region
          %265 = dma.done [#allocation3], 128
        $region48: #{tpu_custom_call.1} parent=43 // pred_fallthru
          _
        // Predicated region
        $region49: #{tpu_custom_call.1} parent=43 // pred_check
          %p266 = pneg %p137
        $region50: #{tpu_custom_call.1} parent=43 // pred_check_branch
          %268 = sbr.rel (%p266) target = $region52
        $region51: #{tpu_custom_call.1} parent=43 // pred_region
          %270 = dma.done [#allocation6], 1024
        $region52: #{tpu_custom_call.1} parent=43 // pred_fallthru
          _
        %p271 = scmp.lt.s32.totalorder %s22, 1
        %s272 = scalar_select %p271, %s22, 1
        %s273 = smul.addr %s272, 16
        %s274 = smul.addr %s273, 4
        %s275 = scalar_lea.vmem %s0, %s274
        %p276 = pneg %p43
        %p277 = pneg %p40
        %p278 = scmp.lt.s32.totalorder %s22, 1
        %s279 = scalar_select %p278, %s22, 1
        %s280 = smul.addr %s279, 16
        %s281 = smul.addr %s280, 8
        %s282 = scalar_lea.vmem %s1, %s281
        %p283 = pneg %p69
        %p284 = pneg %p66
        %p285 = scmp.lt.s32.totalorder %s22, 1
        %s286 = scalar_select %p285, %s22, 1
        %s287 = scalar_lea.vmem %s2, %s286
        %p288 = pneg %p95
        %p289 = pneg %p92
        %p290 = pneg %p116
        %p291 = pneg %p113
        %p292 = pneg %p137
        %p293 = pneg %p134
        %p294 = pneg %p158
        %p295 = pneg %p155
        %p296 = pneg %p184
        %p297 = pneg %p181
        %s298 = sand.u32 %s171, 1
        %s299 = scalar_lea.sflag [#allocation4], %s298
        %s300 = sand.u32 %s171, 1
        %s301 = scalar_lea.vmem [#allocation7], %s300
        %p302 = scmp.lt.s32.totalorder %s22, 1
        %s303 = scalar_select %p302, %s22, 1
        %s304 = smul.addr %s303, 16
        %s305 = smul.addr %s304, 4
        %s306 = scalar_lea.vmem %s0, %s305
        %p307 = scmp.lt.s32.totalorder %s22, 1
        %s308 = scalar_select %p307, %s22, 1
        %s309 = smul.addr %s308, 16
        %s310 = smul.addr %s309, 8
        %s311 = scalar_lea.vmem %s1, %s310
        %p312 = scmp.lt.s32.totalorder %s22, 1
        %s313 = scalar_select %p312, %s22, 1
        %s314 = scalar_lea.vmem %s2, %s313
        %v315 = vld [vmem:[%s306] sm:$0xf]
        %v316 = vld [vmem:[%s306 + $0x4] sm:$0xf]
        %v317 = vld [vmem:[%s306 + $0x8] sm:$0xf]
        %v318 = vld [vmem:[%s306 + $0xc] sm:$0xf]
        %v319 = vld [vmem:[%s306 + $0x10] sm:$0xf]
        %v320 = vld [vmem:[%s306 + $0x14] sm:$0xf]
        %v321 = vld [vmem:[%s306 + $0x18] sm:$0xf]
        %v322 = vld [vmem:[%s306 + $0x1c] sm:$0xf]
        %v323 = vld [vmem:[%s306 + $0x20] sm:$0xf]
        %v324 = vld [vmem:[%s306 + $0x24] sm:$0xf]
        %v325 = vld [vmem:[%s306 + $0x28] sm:$0xf]
        %v326 = vld [vmem:[%s306 + $0x2c] sm:$0xf]
        %v327 = vld [vmem:[%s306 + $0x30] sm:$0xf]
        %v328 = vld [vmem:[%s306 + $0x34] sm:$0xf]
        %v329 = vld [vmem:[%s306 + $0x38] sm:$0xf]
        %v330 = vld [vmem:[%s306 + $0x3c] sm:$0xf]
        %v331 = vld [vmem:[%s311] sm:$0xff]
        %v332 = vld [vmem:[%s311 + $0x8] sm:$0xff]
        %v333 = vld [vmem:[%s311 + $0x10] sm:$0xff]
        %v334 = vld [vmem:[%s311 + $0x18] sm:$0xff]
        %v335 = vld [vmem:[%s311 + $0x20] sm:$0xff]
        %v336 = vld [vmem:[%s311 + $0x28] sm:$0xff]
        %v337 = vld [vmem:[%s311 + $0x30] sm:$0xff]
        %v338 = vld [vmem:[%s311 + $0x38] sm:$0xff]
        %v339 = vld [vmem:[%s311 + $0x40] sm:$0xff]
        %v340 = vld [vmem:[%s311 + $0x48] sm:$0xff]
        %v341 = vld [vmem:[%s311 + $0x50] sm:$0xff]
        %v342 = vld [vmem:[%s311 + $0x58] sm:$0xff]
        %v343 = vld [vmem:[%s311 + $0x60] sm:$0xff]
        %v344 = vld [vmem:[%s311 + $0x68] sm:$0xff]
        %v345 = vld [vmem:[%s311 + $0x70] sm:$0xff]
        %v346 = vld [vmem:[%s311 + $0x78] sm:$0xff]
        %v347 = vld [vmem:[#allocation2] sm:$0x1]
        %v348 = vld [vmem:[#allocation2 + $0x1] sm:$0x1]
        %v349 = vld [vmem:[#allocation2 + $0x2] sm:$0x1]
        %v350 = vld [vmem:[#allocation2 + $0x3] sm:$0x1]
        %352 = vset.pattern.permute.xlu0 0
        %353 = vperm.xlu0 %352, %v331
        %v354 = vpop.permute.xlu0 %353
        %357 = vset.pattern.permute.xlu0 0
        %358 = vperm.xlu0 %357, %v332
        %v359 = vpop.permute.xlu0 %358
        %362 = vset.pattern.permute.xlu0 0
        %363 = vperm.xlu0 %362, %v333
        %v364 = vpop.permute.xlu0 %363
        %367 = vset.pattern.permute.xlu0 0
        %368 = vperm.xlu0 %367, %v334
        %v369 = vpop.permute.xlu0 %368
        %372 = vset.pattern.permute.xlu0 0
        %373 = vperm.xlu0 %372, %v335
        %v374 = vpop.permute.xlu0 %373
        %377 = vset.pattern.permute.xlu0 0
        %378 = vperm.xlu0 %377, %v336
        %v379 = vpop.permute.xlu0 %378
        %382 = vset.pattern.permute.xlu0 0
        %383 = vperm.xlu0 %382, %v337
        %v384 = vpop.permute.xlu0 %383
        %387 = vset.pattern.permute.xlu0 0
        %388 = vperm.xlu0 %387, %v338
        %v389 = vpop.permute.xlu0 %388
        %392 = vset.pattern.permute.xlu0 0
        %393 = vperm.xlu0 %392, %v339
        %v394 = vpop.permute.xlu0 %393
        %397 = vset.pattern.permute.xlu0 0
        %398 = vperm.xlu0 %397, %v340
        %v399 = vpop.permute.xlu0 %398
        %402 = vset.pattern.permute.xlu0 0
        %403 = vperm.xlu0 %402, %v341
        %v404 = vpop.permute.xlu0 %403
        %407 = vset.pattern.permute.xlu0 0
        %408 = vperm.xlu0 %407, %v342
        %v409 = vpop.permute.xlu0 %408
        %412 = vset.pattern.permute.xlu0 0
        %413 = vperm.xlu0 %412, %v343
        %v414 = vpop.permute.xlu0 %413
        %417 = vset.pattern.permute.xlu0 0
        %418 = vperm.xlu0 %417, %v344
        %v419 = vpop.permute.xlu0 %418
        %422 = vset.pattern.permute.xlu0 0
        %423 = vperm.xlu0 %422, %v345
        %v424 = vpop.permute.xlu0 %423
        %427 = vset.pattern.permute.xlu0 0
        %428 = vperm.xlu0 %427, %v346
        %v429 = vpop.permute.xlu0 %428
        %v431 = vperm.slane %v347, 0
        %v432 = vmul.f32 %v354, %v431
        %v433 = vmul.f32 %v359, %v431
        %v434 = vmul.f32 %v364, %v431
        %v435 = vmul.f32 %v369, %v431
        %v436 = vmul.f32 %v374, %v431
        %v437 = vmul.f32 %v379, %v431
        %v438 = vmul.f32 %v384, %v431
        %v439 = vmul.f32 %v389, %v431
        %v440 = vmul.f32 %v394, %v431
        %v441 = vmul.f32 %v399, %v431
        %v442 = vmul.f32 %v404, %v431
        %v443 = vmul.f32 %v409, %v431
        %v444 = vmul.f32 %v414, %v431
        %v445 = vmul.f32 %v419, %v431
        %v446 = vmul.f32 %v424, %v431
        %v447 = vmul.f32 %v429, %v431
        %v448 = vpack.c.bf16 %v433, %v432
        %v449 = vpack.c.bf16 %v435, %v434
        %v450 = vpack.c.bf16 %v437, %v436
        %v451 = vpack.c.bf16 %v439, %v438
        %v452 = vpack.c.bf16 %v441, %v440
        %v453 = vpack.c.bf16 %v443, %v442
        %v454 = vpack.c.bf16 %v445, %v444
        %v455 = vpack.c.bf16 %v447, %v446
        %v456 = vperm.slane %v348, 0
        %v473 = vunpack.c.l.b16 %v315
        %v474 = vunpack.c.l.b16 %v316
        %v475 = vunpack.c.l.b16 %v317
        %v476 = vunpack.c.l.b16 %v318
        %v477 = vunpack.c.l.b16 %v319
        %v478 = vunpack.c.l.b16 %v320
        %v479 = vunpack.c.l.b16 %v321
        %v480 = vunpack.c.l.b16 %v322
        %v481 = vunpack.c.l.b16 %v323
        %v482 = vunpack.c.l.b16 %v324
        %v483 = vunpack.c.l.b16 %v325
        %v484 = vunpack.c.l.b16 %v326
        %v485 = vunpack.c.l.b16 %v327
        %v486 = vunpack.c.l.b16 %v328
        %v487 = vunpack.c.l.b16 %v329
        %v488 = vunpack.c.l.b16 %v330
        %v489 = vpack.c.b16 %v474, %v473
        %v490 = vpack.c.b16 %v476, %v475
        %v491 = vpack.c.b16 %v478, %v477
        %v492 = vpack.c.b16 %v480, %v479
        %v493 = vpack.c.b16 %v482, %v481
        %v494 = vpack.c.b16 %v484, %v483
        %v495 = vpack.c.b16 %v486, %v485
        %v496 = vpack.c.b16 %v488, %v487
        %505 = vmatpush.bf16.msra.mxu0 %v455
        %506 = vmatpush.bf16.msra.mxu0 %v454
        %507 = vmatpush.bf16.msra.mxu0 %v453
        %508 = vmatpush.bf16.msra.mxu0 %v452
        %509 = vmatpush.bf16.msra.mxu0 %v451
        %510 = vmatpush.bf16.msra.mxu0 %v450
        %511 = vmatpush.bf16.msra.mxu0 %v449
        %512 = vmatpush.bf16.msra.mxu0 %v448
        %513 = vmatmul.bf16.gmra.mxu0 %v489
        %v514 = vpop.f32.mrf.mxu0
        %v515 = vadd.f32 %v456, %v514
        %v516 = vpop.f32.mrf.mxu0
        %v517 = vadd.f32 %v456, %v516
        %518 = vmatmul.bf16.gmra.mxu0 %v490
        %v519 = vpop.f32.mrf.mxu0
        %v520 = vadd.f32 %v456, %v519
        %v521 = vpop.f32.mrf.mxu0
        %v522 = vadd.f32 %v456, %v521
        %523 = vmatmul.bf16.gmra.mxu0 %v491
        %v524 = vpop.f32.mrf.mxu0
        %v525 = vadd.f32 %v456, %v524
        %v526 = vpop.f32.mrf.mxu0
        %v527 = vadd.f32 %v456, %v526
        %528 = vmatmul.bf16.gmra.mxu0 %v492
        %v529 = vpop.f32.mrf.mxu0
        %v530 = vadd.f32 %v456, %v529
        %v531 = vpop.f32.mrf.mxu0
        %v532 = vadd.f32 %v456, %v531
        %533 = vmatmul.bf16.gmra.mxu0 %v493
        %v534 = vpop.f32.mrf.mxu0
        %v535 = vadd.f32 %v456, %v534
        %v536 = vpop.f32.mrf.mxu0
        %v537 = vadd.f32 %v456, %v536
        %538 = vmatmul.bf16.gmra.mxu0 %v494
        %v539 = vpop.f32.mrf.mxu0
        %v540 = vadd.f32 %v456, %v539
        %v541 = vpop.f32.mrf.mxu0
        %v542 = vadd.f32 %v456, %v541
        %543 = vmatmul.bf16.gmra.mxu0 %v495
        %v544 = vpop.f32.mrf.mxu0
        %v545 = vadd.f32 %v456, %v544
        %v546 = vpop.f32.mrf.mxu0
        %v547 = vadd.f32 %v456, %v546
        %548 = vmatmul.bf16.gmra.mxu0 %v496
        %v549 = vpop.f32.mrf.mxu0
        %v550 = vadd.f32 %v456, %v549
        %v551 = vpop.f32.mrf.mxu0
        %v552 = vadd.f32 %v456, %v551
        %553 = vdwg.mxu0
        %v554 = vmax.f32 %v515, 0.0
        %v555 = vmax.f32 %v517, 0.0
        %v556 = vmax.f32 %v520, 0.0
        %v557 = vmax.f32 %v522, 0.0
        %v558 = vmax.f32 %v525, 0.0
        %v559 = vmax.f32 %v527, 0.0
        %v560 = vmax.f32 %v530, 0.0
        %v561 = vmax.f32 %v532, 0.0
        %v562 = vmax.f32 %v535, 0.0
        %v563 = vmax.f32 %v537, 0.0
        %v564 = vmax.f32 %v540, 0.0
        %v565 = vmax.f32 %v542, 0.0
        %v566 = vmax.f32 %v545, 0.0
        %v567 = vmax.f32 %v547, 0.0
        %v568 = vmax.f32 %v550, 0.0
        %v569 = vmax.f32 %v552, 0.0
        %v570 = vpack.c.bf16 %v555, %v554
        %v571 = vpack.c.bf16 %v557, %v556
        %v572 = vpack.c.bf16 %v559, %v558
        %v573 = vpack.c.bf16 %v561, %v560
        %v574 = vpack.c.bf16 %v563, %v562
        %v575 = vpack.c.bf16 %v565, %v564
        %v576 = vpack.c.bf16 %v567, %v566
        %v577 = vpack.c.bf16 %v569, %v568
        %v578 = vld [vmem:[#allocation5] sm:$0xf]
        %v579 = vld [vmem:[#allocation5 + $0x4] sm:$0xf]
        %v580 = vld [vmem:[#allocation5 + $0x8] sm:$0xf]
        %v581 = vld [vmem:[#allocation5 + $0xc] sm:$0xf]
        %v582 = vld [vmem:[#allocation5 + $0x10] sm:$0xf]
        %v583 = vld [vmem:[#allocation5 + $0x14] sm:$0xf]
        %v584 = vld [vmem:[#allocation5 + $0x18] sm:$0xf]
        %v585 = vld [vmem:[#allocation5 + $0x1c] sm:$0xf]
        %v586 = vld [vmem:[#allocation5 + $0x20] sm:$0xf]
        %v587 = vld [vmem:[#allocation5 + $0x24] sm:$0xf]
        %v588 = vld [vmem:[#allocation5 + $0x28] sm:$0xf]
        %v589 = vld [vmem:[#allocation5 + $0x2c] sm:$0xf]
        %v590 = vld [vmem:[#allocation5 + $0x30] sm:$0xf]
        %v591 = vld [vmem:[#allocation5 + $0x34] sm:$0xf]
        %v592 = vld [vmem:[#allocation5 + $0x38] sm:$0xf]
        %v593 = vld [vmem:[#allocation5 + $0x3c] sm:$0xf]
        %v610 = vunpack.c.l.b16 %v578
        %v611 = vunpack.c.l.b16 %v579
        %v612 = vunpack.c.l.b16 %v580
        %v613 = vunpack.c.l.b16 %v581
        %v614 = vunpack.c.l.b16 %v582
        %v615 = vunpack.c.l.b16 %v583
        %v616 = vunpack.c.l.b16 %v584
        %v617 = vunpack.c.l.b16 %v585
        %v618 = vunpack.c.l.b16 %v586
        %v619 = vunpack.c.l.b16 %v587
        %v620 = vunpack.c.l.b16 %v588
        %v621 = vunpack.c.l.b16 %v589
        %v622 = vunpack.c.l.b16 %v590
        %v623 = vunpack.c.l.b16 %v591
        %v624 = vunpack.c.l.b16 %v592
        %v625 = vunpack.c.l.b16 %v593
        %v626 = vpack.c.b16 %v611, %v610
        %v627 = vpack.c.b16 %v613, %v612
        %v628 = vpack.c.b16 %v615, %v614
        %v629 = vpack.c.b16 %v617, %v616
        %v630 = vpack.c.b16 %v619, %v618
        %v631 = vpack.c.b16 %v621, %v620
        %v632 = vpack.c.b16 %v623, %v622
        %v633 = vpack.c.b16 %v625, %v624
        %642 = vmatpush.bf16.msra.mxu0 %v633
        %643 = vmatpush.bf16.msra.mxu0 %v632
        %644 = vmatpush.bf16.msra.mxu0 %v631
        %645 = vmatpush.bf16.msra.mxu0 %v630
        %646 = vmatpush.bf16.msra.mxu0 %v629
        %647 = vmatpush.bf16.msra.mxu0 %v628
        %648 = vmatpush.bf16.msra.mxu0 %v627
        %649 = vmatpush.bf16.msra.mxu0 %v626
        %650 = vmatmul.bf16.gmra.mxu0 %v570
        %v651 = vpop.f32.mrf.mxu0
        %v652 = vadd.f32 0.0, %v651
        %v653 = vpop.f32.mrf.mxu0
        %v654 = vadd.f32 0.0, %v653
        %655 = vmatmul.bf16.gmra.mxu0 %v571
        %v656 = vpop.f32.mrf.mxu0
        %v657 = vadd.f32 0.0, %v656
        %v658 = vpop.f32.mrf.mxu0
        %v659 = vadd.f32 0.0, %v658
        %660 = vmatmul.bf16.gmra.mxu0 %v572
        %v661 = vpop.f32.mrf.mxu0
        %v662 = vadd.f32 0.0, %v661
        %v663 = vpop.f32.mrf.mxu0
        %v664 = vadd.f32 0.0, %v663
        %665 = vmatmul.bf16.gmra.mxu0 %v573
        %v666 = vpop.f32.mrf.mxu0
        %v667 = vadd.f32 0.0, %v666
        %v668 = vpop.f32.mrf.mxu0
        %v669 = vadd.f32 0.0, %v668
        %670 = vmatmul.bf16.gmra.mxu0 %v574
        %v671 = vpop.f32.mrf.mxu0
        %v672 = vadd.f32 0.0, %v671
        %v673 = vpop.f32.mrf.mxu0
        %v674 = vadd.f32 0.0, %v673
        %675 = vmatmul.bf16.gmra.mxu0 %v575
        %v676 = vpop.f32.mrf.mxu0
        %v677 = vadd.f32 0.0, %v676
        %v678 = vpop.f32.mrf.mxu0
        %v679 = vadd.f32 0.0, %v678
        %680 = vmatmul.bf16.gmra.mxu0 %v576
        %v681 = vpop.f32.mrf.mxu0
        %v682 = vadd.f32 0.0, %v681
        %v683 = vpop.f32.mrf.mxu0
        %v684 = vadd.f32 0.0, %v683
        %685 = vmatmul.bf16.gmra.mxu0 %v577
        %v686 = vpop.f32.mrf.mxu0
        %v687 = vadd.f32 0.0, %v686
        %v688 = vpop.f32.mrf.mxu0
        %v689 = vadd.f32 0.0, %v688
        %690 = vdwg.mxu0
        %v691 = vpack.c.bf16 %v654, %v652
        %v692 = vpack.c.bf16 %v659, %v657
        %v693 = vpack.c.bf16 %v664, %v662
        %v694 = vpack.c.bf16 %v669, %v667
        %v695 = vpack.c.bf16 %v674, %v672
        %v696 = vpack.c.bf16 %v679, %v677
        %v697 = vpack.c.bf16 %v684, %v682
        %v698 = vpack.c.bf16 %v689, %v687
        %v699 = vperm.slane %v349, 0
        %700 = vmatpush.bf16.msra.mxu0 %v698
        %701 = vmatpush.bf16.msra.mxu0 %v697
        %702 = vmatpush.bf16.msra.mxu0 %v696
        %703 = vmatpush.bf16.msra.mxu0 %v695
        %704 = vmatpush.bf16.msra.mxu0 %v694
        %705 = vmatpush.bf16.msra.mxu0 %v693
        %706 = vmatpush.bf16.msra.mxu0 %v692
        %707 = vmatpush.bf16.msra.mxu0 %v691
        %708 = vmatmul.bf16.gmra.mxu0 %v489
        %v709 = vpop.f32.mrf.mxu0
        %v710 = vadd.f32 %v699, %v709
        %v711 = vpop.f32.mrf.mxu0
        %v712 = vadd.f32 %v699, %v711
        %713 = vmatmul.bf16.gmra.mxu0 %v490
        %v714 = vpop.f32.mrf.mxu0
        %v715 = vadd.f32 %v699, %v714
        %v716 = vpop.f32.mrf.mxu0
        %v717 = vadd.f32 %v699, %v716
        %718 = vmatmul.bf16.gmra.mxu0 %v491
        %v719 = vpop.f32.mrf.mxu0
        %v720 = vadd.f32 %v699, %v719
        %v721 = vpop.f32.mrf.mxu0
        %v722 = vadd.f32 %v699, %v721
        %723 = vmatmul.bf16.gmra.mxu0 %v492
        %v724 = vpop.f32.mrf.mxu0
        %v725 = vadd.f32 %v699, %v724
        %v726 = vpop.f32.mrf.mxu0
        %v727 = vadd.f32 %v699, %v726
        %728 = vmatmul.bf16.gmra.mxu0 %v493
        %v729 = vpop.f32.mrf.mxu0
        %v730 = vadd.f32 %v699, %v729
        %v731 = vpop.f32.mrf.mxu0
        %v732 = vadd.f32 %v699, %v731
        %733 = vmatmul.bf16.gmra.mxu0 %v494
        %v734 = vpop.f32.mrf.mxu0
        %v735 = vadd.f32 %v699, %v734
        %v736 = vpop.f32.mrf.mxu0
        %v737 = vadd.f32 %v699, %v736
        %738 = vmatmul.bf16.gmra.mxu0 %v495
        %v739 = vpop.f32.mrf.mxu0
        %v740 = vadd.f32 %v699, %v739
        %v741 = vpop.f32.mrf.mxu0
        %v742 = vadd.f32 %v699, %v741
        %743 = vmatmul.bf16.gmra.mxu0 %v496
        %v744 = vpop.f32.mrf.mxu0
        %v745 = vadd.f32 %v699, %v744
        %v746 = vpop.f32.mrf.mxu0
        %v747 = vadd.f32 %v699, %v746
        %748 = vdwg.mxu0
        %v749 = vmax.f32 %v710, 0.0
        %v750 = vmax.f32 %v712, 0.0
        %v751 = vmax.f32 %v715, 0.0
        %v752 = vmax.f32 %v717, 0.0
        %v753 = vmax.f32 %v720, 0.0
        %v754 = vmax.f32 %v722, 0.0
        %v755 = vmax.f32 %v725, 0.0
        %v756 = vmax.f32 %v727, 0.0
        %v757 = vmax.f32 %v730, 0.0
        %v758 = vmax.f32 %v732, 0.0
        %v759 = vmax.f32 %v735, 0.0
        %v760 = vmax.f32 %v737, 0.0
        %v761 = vmax.f32 %v740, 0.0
        %v762 = vmax.f32 %v742, 0.0
        %v763 = vmax.f32 %v745, 0.0
        %v764 = vmax.f32 %v747, 0.0
        %v765 = vld [vmem:[%s314] sm:$0x1]
        %766 = vmatpush.msra.mxu0 %v764
        %767 = vmatpush.msra.mxu0 %v763
        %768 = vmatpush.msra.mxu0 %v762
        %769 = vmatpush.msra.mxu0 %v761
        %770 = vmatpush.msra.mxu0 %v760
        %771 = vmatpush.msra.mxu0 %v759
        %772 = vmatpush.msra.mxu0 %v758
        %773 = vmatpush.msra.mxu0 %v757
        %774 = vmatpush.msra.mxu0 %v756
        %775 = vmatpush.msra.mxu0 %v755
        %776 = vmatpush.msra.mxu0 %v754
        %777 = vmatpush.msra.mxu0 %v753
        %778 = vmatpush.msra.mxu0 %v752
        %779 = vmatpush.msra.mxu0 %v751
        %780 = vmatpush.msra.mxu0 %v750
        %781 = vmatpush.msra.mxu0 %v749
        %782 = vmatmul.f32.gmra.mxu0 %v765
        %v783 = vpop.f32.mrf.mxu0
        %v784 = vadd.f32 0.0, %v783
        %785 = vdwg.mxu0
        %v786 = vld [vmem:[%s5] sm:$0xff]
        %v787 = vld [vmem:[%s5 + $0x8] sm:$0xff]
        %v788 = vld [vmem:[%s5 + $0x10] sm:$0xff]
        %v789 = vld [vmem:[%s5 + $0x18] sm:$0xff]
        %v790 = vld [vmem:[%s5 + $0x20] sm:$0xff]
        %v791 = vld [vmem:[%s5 + $0x28] sm:$0xff]
        %v792 = vld [vmem:[%s5 + $0x30] sm:$0xff]
        %v793 = vld [vmem:[%s5 + $0x38] sm:$0xff]
        %v794 = vld [vmem:[%s5 + $0x40] sm:$0xff]
        %v795 = vld [vmem:[%s5 + $0x48] sm:$0xff]
        %v796 = vld [vmem:[%s5 + $0x50] sm:$0xff]
        %v797 = vld [vmem:[%s5 + $0x58] sm:$0xff]
        %v798 = vld [vmem:[%s5 + $0x60] sm:$0xff]
        %v799 = vld [vmem:[%s5 + $0x68] sm:$0xff]
        %v800 = vld [vmem:[%s5 + $0x70] sm:$0xff]
        %v801 = vld [vmem:[%s5 + $0x78] sm:$0xff]
        %802 = vmatpush.msra.mxu0 %v801
        %803 = vmatpush.msra.mxu0 %v800
        %804 = vmatpush.msra.mxu0 %v799
        %805 = vmatpush.msra.mxu0 %v798
        %806 = vmatpush.msra.mxu0 %v797
        %807 = vmatpush.msra.mxu0 %v796
        %808 = vmatpush.msra.mxu0 %v795
        %809 = vmatpush.msra.mxu0 %v794
        %810 = vmatpush.msra.mxu0 %v793
        %811 = vmatpush.msra.mxu0 %v792
        %812 = vmatpush.msra.mxu0 %v791
        %813 = vmatpush.msra.mxu0 %v790
        %814 = vmatpush.msra.mxu0 %v789
        %815 = vmatpush.msra.mxu0 %v788
        %816 = vmatpush.msra.mxu0 %v787
        %817 = vmatpush.msra.mxu0 %v786
        %818 = vmatmul.f32.gmra.mxu0 %v784
        %v819 = vpop.f32.mrf.mxu0
        %v820 = vadd.f32 %v350, %v819
        %821 = vdwg.mxu0
        %822 = vst [vmem:[%s301] sm:$0x1] %v820
        %s823 = sand.u32 %s171, 1
        %s824 = scalar_lea.sflag [#allocation4], %s823
        %s825 = sand.u32 %s171, 1
        %s826 = scalar_lea.vmem [#allocation7], %s825
        // Predicated region
        $region53: #{tpu_custom_call.1} parent=43 // pred_check
          %p827 = pneg %p181
        $region54: #{tpu_custom_call.1} parent=43 // pred_check_branch
          %829 = sbr.rel (%p827) target = $region56
        $region55: #{tpu_custom_call.1} parent=43 // pred_region
          %831 = vsyncadd %s824, 0
          %s832 = scalar_lea.hbm %s6, %s22
          %s834 = sshll.u32 %s826, 4
          %s835 = int_to_ptr.vmem [resolvable:$true] %s834
          %s836 = sshll.u32 %s832, 4
          %s837 = int_to_ptr.hbm [resolvable:$true] %s836
          %839 = dma.vmem_to_hbm [thread:$0]  %s835, 16, %s837, %s824
        $region56: #{tpu_custom_call.1} parent=43 // pred_fallthru
          _
      $region44: #{tpu_custom_call.1} parent=5 // pred_fallthru
        _
      %p840 = scmp.le.s32.totalorder 2, %s17
      // Predicated region
      $region57: #{tpu_custom_call.1} parent=5 // pred_check
        %p841 = pneg %p840
      $region58: #{tpu_custom_call.1} parent=5 // pred_check_branch
        %843 = sbr.rel (%p841) target = $region60
      $region59: #{tpu_custom_call.1} parent=5 // pred_region
        %s844 = ssub.s32 %s17, 2
        // Predicated region
        $region61: #{tpu_custom_call.1} parent=59 // pred_check
          %p845 = pneg %p187
        $region62: #{tpu_custom_call.1} parent=59 // pred_check_branch
          %847 = sbr.rel (%p845) target = $region64
        $region63: #{tpu_custom_call.1} parent=59 // pred_region
          %s848 = sand.u32 %s172, 1
          %s849 = scalar_lea.sflag [#allocation4], %s848
          %s850 = sand.u32 %s172, 1
          %s851 = scalar_lea.vmem [#allocation7], %s850
          %853 = dma.done %s849, 16
        $region64: #{tpu_custom_call.1} parent=59 // pred_fallthru
          _
      $region60: #{tpu_custom_call.1} parent=5 // pred_fallthru
        _
    $region6: #{tpu_custom_call.1} parent=1 // loop_footer
      %s21 = sadd.s32 1, %s17
    $region7: #{tpu_custom_call.1} parent=1 // loop_footer_branch
      %16 = sbr.rel target = $region3
    $region8: #{tpu_custom_call.1} parent=1 // loop_exit
      _
    %854 = vsyncpa [#allocation3], 1
    %s855 = scalar_lea.sflag [#allocation3], 1
    %856 = vsyncpa %s855, 1
    %857 = vsyncpa [#allocation6], 1
    %858 = vsyncpa [#allocation4], 1
    %s859 = scalar_lea.sflag [#allocation4], 1
    %860 = vsyncpa %s859, 1

</llo_original>
